<compile_context>
chip_gen: v7x
topology: tpu7x:2x2x1
jax: 0.10.0
libtpu: 0.0.40
codegen_flags: <defaults>
</compile_context>

<pallas_src>
import functools

import jax
import jax.numpy as jnp
from jax import lax
from jax.experimental import pallas as pl
from jax.experimental.pallas import tpu as pltpu

EPS = 1e-3  # config.eps


def _d2mp_ob_loss_kernel(x0_ref, e_ref, ctx_ref, t_ref,
                         w1x_ref, w1c_ref, w1b_ref, b1_ref, w2_ref, b2_ref,
                         out_ref, *, batch, block_b):
    # Transposed (lane-dense) blocks:
    #   x0_ref, e_ref : (D,  TB) f32      ctx_ref : (Cd, TB) bf16
    #   t_ref         : (1,  TB) f32
    #   w1x_ref (H,D) bf16   w1c_ref (H,Cd) bf16   w1b_ref (H,1) f32
    #   b1_ref  (H,1) f32    w2_ref  (D,H)  bf16   b2_ref  (D,1) f32
    #   out_ref (1,128) f32  -- this tile's partial loss sum in lane 0
    step = pl.program_id(0)

    lane = lax.broadcasted_iota(jnp.int32, (1, block_b), 1)
    valid = (step * block_b + lane) < batch                    # (1, TB) ragged-tile mask

    # Per-sample scalars, lane-dense on a (1, TB) row.
    t = jnp.where(valid, t_ref[...], 1.0)                      # clamp garbage lanes
    sqrt_t = jnp.sqrt(t)
    inv_sqrt_t = lax.rsqrt(t)                                  # EUP, not divide
    beta = jnp.log(t) * 0.25

    x0 = x0_ref[...]                                           # (D, TB) f32
    e = e_ref[...]                                             # (D, TB) f32

    # ---- q_sample:  C = -x0 ;  x_noisy = x0 + C*t + sqrt(t)*e ----
    C = -x0
    x_noisy = x0 * (1.0 - t) + sqrt_t * e                      # (D, TB)

    # ---- synthetic diffnet (2-layer MLP): bf16 MXU, f32 accumulation ----
    h = (jnp.dot(w1x_ref[...], x_noisy.astype(jnp.bfloat16),
                 preferred_element_type=jnp.float32)
         + jnp.dot(w1c_ref[...], ctx_ref[...],
                   preferred_element_type=jnp.float32)
         + w1b_ref[...] * beta
         + b1_ref[...])                                        # (H, TB) f32
    h = jnp.maximum(h, 0.0).astype(jnp.bfloat16)
    c_pred = (jnp.dot(w2_ref[...], h, preferred_element_type=jnp.float32)
              + b2_ref[...])                                   # (D, TB) f32

    # ---- noise_pred = (x_noisy - (t - 1) * C_pred) / sqrt(t) ----
    noise_pred = (x_noisy - (t - 1.0) * c_pred) * inv_sqrt_t

    # ---- weighted smooth-L1 loss (PyTorch default beta=1.0) ----
    def smooth_l1(p, q):
        d = p - q
        ad = jnp.abs(d)
        return jnp.where(ad < 1.0, 0.5 * d * d, ad - 0.5)

    poly = t * t - t + 1.0                                     # (1, TB)
    sw1 = poly / t
    sw2 = poly / (1.0 - t + EPS)
    wloss = sw1 * smooth_l1(c_pred, C) + sw2 * smooth_l1(noise_pred, e)   # (D, TB)

    per_sample = jnp.sum(wloss, axis=0, keepdims=True)         # (1, TB)
    tile_sum = jnp.sum(jnp.where(valid, per_sample, 0.0))      # scalar

    out_lane = lax.broadcasted_iota(jnp.int32, (1, 128), 1)
    out_ref[...] = jnp.where(out_lane == 0, tile_sum, 0.0)


def d2mp_ob_loss(x0, e_rand, t, context, params, *, block_b=4096):
    """D2MP_OB.forward loss.

    block_b: batch-tile size along the lane axis (rounded to a multiple of 128
    when tiling).  4096 rows amortize the ~0.35 us per-grid-step overhead while
    using only a few MiB of VMEM (fine even on v7x's 64 MiB)."""
    B, D = x0.shape
    Cd = context.shape[1]
    H = params["w1x"].shape[1]

    # ---- host-side layout plumbing: batch -> lane axis (no big concat) ----
    x0_t = x0.T.astype(jnp.float32)                       # (D,  B)
    e_t = e_rand.T.astype(jnp.float32)                    # (D,  B)
    ctx_t = context.T.astype(jnp.bfloat16)                # (Cd, B) matmul-only -> bf16
    t_row = t.reshape(1, B).astype(jnp.float32)           # (1,  B)

    w1x_t = params["w1x"].T.astype(jnp.bfloat16)          # (H, D)
    w1c_t = params["w1c"].T.astype(jnp.bfloat16)          # (H, Cd)
    w1b_t = params["w1b"].reshape(H, 1).astype(jnp.float32)
    b1_t = params["b1"].reshape(H, 1).astype(jnp.float32)
    w2_t = params["w2"].T.astype(jnp.bfloat16)            # (D, H)
    b2_t = params["b2"].reshape(D, 1).astype(jnp.float32)

    # ---- batch tiling on the lane axis (multiple of 128, or whole batch) ----
    if B <= block_b or B <= 128:
        tb = B
    else:
        tb = max(128, (min(block_b, B) // 128) * 128)
    nb = (B + tb - 1) // tb

    kernel = functools.partial(_d2mp_ob_loss_kernel, batch=B, block_b=tb)

    partials = pl.pallas_call(
        kernel,
        out_shape=jax.ShapeDtypeStruct((1, nb * 128), jnp.float32),
        grid=(nb,),
        in_specs=[
            pl.BlockSpec((D, tb), lambda i: (0, i)),      # x0^T   (streamed)
            pl.BlockSpec((D, tb), lambda i: (0, i)),      # e^T    (streamed)
            pl.BlockSpec((Cd, tb), lambda i: (0, i)),     # ctx^T  (streamed, bf16)
            pl.BlockSpec((1, tb), lambda i: (0, i)),      # t row  (streamed)
            pl.BlockSpec((H, D), lambda i: (0, 0)),       # W1x^T  (resident)
            pl.BlockSpec((H, Cd), lambda i: (0, 0)),      # W1c^T  (resident)
            pl.BlockSpec((H, 1), lambda i: (0, 0)),       # w1b^T  (resident)
            pl.BlockSpec((H, 1), lambda i: (0, 0)),       # b1^T   (resident)
            pl.BlockSpec((D, H), lambda i: (0, 0)),       # W2^T   (resident)
            pl.BlockSpec((D, 1), lambda i: (0, 0)),       # b2^T   (resident)
        ],
        out_specs=pl.BlockSpec((1, 128), lambda i: (0, i)),   # per-tile partial sums
        compiler_params=pltpu.CompilerParams(
            # no grid-carried state (per-tile partials) -> batch axis is parallel
            # so the v7x megacore can shard it; harmless on single-TC v5e/v6e.
            dimension_semantics=("parallel",),
            vmem_limit_bytes=48 * 1024 * 1024),
    )(x0_t, e_t, ctx_t, t_row, w1x_t, w1c_t, w1b_t, b1_t, w2_t, b2_t)

    return jnp.sum(partials) / (B * D)


def _reference_bf16(x0, e_rand, t, context, params):
    """Pure-JAX mirror of the kernel arithmetic (bf16 matmuls, f32 everywhere else)."""
    B, D = x0.shape
    t = t.reshape(B, 1).astype(jnp.float32)
    sqrt_t = jnp.sqrt(t)
    inv_sqrt_t = lax.rsqrt(t)
    beta = jnp.log(t) * 0.25
    C = -x0
    x_noisy = x0 * (1.0 - t) + sqrt_t * e_rand

    h = (jnp.dot(x_noisy.astype(jnp.bfloat16), params["w1x"].astype(jnp.bfloat16),
                 preferred_element_type=jnp.float32)
         + jnp.dot(context.astype(jnp.bfloat16), params["w1c"].astype(jnp.bfloat16),
                   preferred_element_type=jnp.float32)
         + beta * params["w1b"] + params["b1"])
    h = jnp.maximum(h, 0.0).astype(jnp.bfloat16)
    c_pred = jnp.dot(h, params["w2"].astype(jnp.bfloat16),
                     preferred_element_type=jnp.float32) + params["b2"]
    noise_pred = (x_noisy - (t - 1.0) * c_pred) * inv_sqrt_t

    def smooth_l1(p, q):
        d = p - q
        ad = jnp.abs(d)
        return jnp.where(ad < 1.0, 0.5 * d * d, ad - 0.5)

    sw1 = (t * t - t + 1.0) / t
    sw2 = (t * t - t + 1.0) / (1.0 - t + EPS)
    loss = sw1 * smooth_l1(c_pred, C) + sw2 * smooth_l1(noise_pred, e_rand)
    return jnp.sum(loss) / (B * D)


def _reference_f32(x0, e_rand, t, context, params):
    """Original-style f32 forward (semantic sanity check, looser tolerance)."""
    B, D = x0.shape
    t = t.reshape(B, 1)
    C = -x0
    sqrt_t = jnp.sqrt(t)
    x_noisy = x0 + C * t + sqrt_t * e_rand
    beta = jnp.log(t) / 4.0
    h = jnp.maximum(x_noisy @ params["w1x"] + beta * params["w1b"]
                    + context @ params["w1c"] + params["b1"], 0.0)
    c_pred = h @ params["w2"] + params["b2"]
    noise_pred = (x_noisy - (t - 1.0) * c_pred) / sqrt_t

    def smooth_l1(p, q):
        d = p - q
        ad = jnp.abs(d)
        return jnp.where(ad < 1.0, 0.5 * d * d, ad - 0.5)

    sw1 = (t * t - t + 1.0) / t
    sw2 = (t * t - t + 1.0) / (1.0 - t + EPS)
    loss = sw1 * smooth_l1(c_pred, C) + sw2 * smooth_l1(noise_pred, e_rand)
    return jnp.mean(loss)


if __name__ == "__main__":
    # batch, point_dim, context dim, hidden dim (small, but batch > 128 so the
    # multi-tile / ragged-lane / partial-sum paths are exercised with block_b=128).
    B, D, CTX, H = 200, 4, 32, 32

    key = jax.random.PRNGKey(0)
    k_x0, k_ctx, k_t, k_noise, k_w1x, k_w1c, k_w2 = jax.random.split(key, 7)

    x0 = jax.random.normal(k_x0, (B, D), dtype=jnp.float32)
    context = jax.random.normal(k_ctx, (B, CTX), dtype=jnp.float32)
    # t = rand(B) * (1 - eps) + eps   (torch.rand equivalent)
    t = jax.random.uniform(k_t, (B,), dtype=jnp.float32) * (1.0 - EPS) + EPS
    # e_rand = randn_like(x_0)
    e_rand = jax.random.normal(k_noise, (B, D), dtype=jnp.float32)

    params = {
        "w1x": jax.random.normal(k_w1x, (D, H), dtype=jnp.float32) / jnp.sqrt(D * 1.0),
        "w1b": jnp.full((1, H), 0.05, dtype=jnp.float32),
        "w1c": jax.random.normal(k_w1c, (CTX, H), dtype=jnp.float32) / jnp.sqrt(CTX * 1.0),
        "b1": jnp.zeros((1, H), dtype=jnp.float32),
        "w2": jax.random.normal(k_w2, (H, D), dtype=jnp.float32) / jnp.sqrt(H * 1.0),
        "b2": jnp.zeros((1, D), dtype=jnp.float32),
    }

    # block_b=128 -> 2 lane tiles (the second ragged: 72 valid of 128 lanes).
    loss = jax.block_until_ready(
        d2mp_ob_loss(x0, e_rand, t, context, params, block_b=128))
    ref_bf16 = jax.block_until_ready(_reference_bf16(x0, e_rand, t, context, params))
    ref_f32 = jax.block_until_ready(_reference_f32(x0, e_rand, t, context, params))

    assert jnp.allclose(loss, ref_bf16, rtol=1e-3, atol=1e-3), (loss, ref_bf16)
    assert jnp.allclose(loss, ref_f32, rtol=2.5e-1, atol=2.5e-1), (loss, ref_f32)
    print("KERNEL_OK")
</pallas_src>

<mosaic_0001>
module attributes {stable_mosaic.version = 11 : i64} {
  func.func @_d2mp_ob_loss_kernel(%arg0: i32, %arg1: memref<4x128xf32, #tpu.memory_space<vmem>>, %arg2: memref<4x128xf32, #tpu.memory_space<vmem>>, %arg3: memref<32x128xbf16, #tpu.memory_space<vmem>>, %arg4: memref<1x128xf32, #tpu.memory_space<vmem>>, %arg5: memref<32x4xbf16, #tpu.memory_space<vmem>>, %arg6: memref<32x32xbf16, #tpu.memory_space<vmem>>, %arg7: memref<32x1xf32, #tpu.memory_space<vmem>>, %arg8: memref<32x1xf32, #tpu.memory_space<vmem>>, %arg9: memref<4x32xbf16, #tpu.memory_space<vmem>>, %arg10: memref<4x1xf32, #tpu.memory_space<vmem>>, %arg11: memref<1x128xf32, #tpu.memory_space<vmem>>) attributes {dimension_semantics = [#tpu.dimension_semantics<parallel>], iteration_bounds = array<i64: 2>, scalar_prefetch = 0 : i64, scratch_operands = 0 : i64, tpu.core_type = #tpu.core_type<tc>, window_params = [{transform_indices = @transform_0, window_bounds = array<i64: 4, 128>}, {transform_indices = @transform_1, window_bounds = array<i64: 4, 128>}, {transform_indices = @transform_2, window_bounds = array<i64: 32, 128>}, {transform_indices = @transform_3, window_bounds = array<i64: 1, 128>}, {pipeline_mode = #tpu.pipeline_mode<synchronous>, transform_indices = @transform_4, window_bounds = array<i64: 32, 4>}, {pipeline_mode = #tpu.pipeline_mode<synchronous>, transform_indices = @transform_5, window_bounds = array<i64: 32, 32>}, {pipeline_mode = #tpu.pipeline_mode<synchronous>, transform_indices = @transform_6, window_bounds = array<i64: 32, 1>}, {pipeline_mode = #tpu.pipeline_mode<synchronous>, transform_indices = @transform_7, window_bounds = array<i64: 32, 1>}, {pipeline_mode = #tpu.pipeline_mode<synchronous>, transform_indices = @transform_8, window_bounds = array<i64: 4, 32>}, {pipeline_mode = #tpu.pipeline_mode<synchronous>, transform_indices = @transform_9, window_bounds = array<i64: 4, 1>}, {transform_indices = @transform_10, window_bounds = array<i64: 1, 128>}]} {
    %0 = tpu.iota {dimensions = array<i32: 1>} : vector<1x128xi32>
    %c128_i32 = arith.constant 128 : i32
    %1 = arith.muli %arg0, %c128_i32 : i32
    %2 = vector.broadcast %1 : i32 to vector<1x128xi32>
    %3 = arith.addi %2, %0 : vector<1x128xi32>
    %c200_i32 = arith.constant 200 : i32
    %4 = vector.broadcast %c200_i32 : i32 to vector<1x128xi32>
    %5 = arith.cmpi slt, %3, %4 : vector<1x128xi32>
    %c0 = arith.constant 0 : index
    %c0_0 = arith.constant 0 : index
    %6 = vector.load %arg4[%c0, %c0_0] : memref<1x128xf32, #tpu.memory_space<vmem>>, vector<1x128xf32>
    %cst = arith.constant 1.000000e+00 : f32
    %7 = vector.broadcast %cst : f32 to vector<1x128xf32>
    %8 = arith.select %5, %6, %7 : vector<1x128xi1>, vector<1x128xf32>
    %9 = math.sqrt %8 : vector<1x128xf32>
    %10 = math.rsqrt %8 : vector<1x128xf32>
    %11 = math.log %8 : vector<1x128xf32>
    %cst_1 = arith.constant 2.500000e-01 : f32
    %12 = vector.broadcast %cst_1 : f32 to vector<1x128xf32>
    %13 = arith.mulf %11, %12 : vector<1x128xf32>
    %c0_2 = arith.constant 0 : index
    %c0_3 = arith.constant 0 : index
    %14 = vector.load %arg1[%c0_2, %c0_3] : memref<4x128xf32, #tpu.memory_space<vmem>>, vector<4x128xf32>
    %c0_4 = arith.constant 0 : index
    %c0_5 = arith.constant 0 : index
    %15 = vector.load %arg2[%c0_4, %c0_5] : memref<4x128xf32, #tpu.memory_space<vmem>>, vector<4x128xf32>
    %cst_6 = arith.constant 0.000000e+00 : f32
    %16 = vector.broadcast %cst_6 : f32 to vector<4x128xf32>
    %17 = arith.subf %16, %14 : vector<4x128xf32>
    %cst_7 = arith.constant 1.000000e+00 : f32
    %18 = vector.broadcast %cst_7 : f32 to vector<1x128xf32>
    %19 = arith.subf %18, %8 : vector<1x128xf32>
    %20 = vector.broadcast %19 : vector<1x128xf32> to vector<4x128xf32>
    %21 = arith.mulf %14, %20 : vector<4x128xf32>
    %22 = vector.broadcast %9 : vector<1x128xf32> to vector<4x128xf32>
    %23 = arith.mulf %22, %15 : vector<4x128xf32>
    %24 = arith.addf %21, %23 : vector<4x128xf32>
    %c0_8 = arith.constant 0 : index
    %c0_9 = arith.constant 0 : index
    %25 = vector.load %arg5[%c0_8, %c0_9] : memref<32x4xbf16, #tpu.memory_space<vmem>>, vector<32x4xbf16>
    %26 = arith.truncf %24 : vector<4x128xf32> to vector<4x128xbf16>
    %cst_10 = arith.constant dense<0.000000e+00> : vector<32x128xf32>
    %27 = tpu.matmul %25, %26, %cst_10 {dimension_numbers = #tpu.dot_dimension_numbers<[1], [0], [0], [1], [0, 0, 1, 1], [], []>} : vector<32x4xbf16>, vector<4x128xbf16>, vector<32x128xf32> -> vector<32x128xf32>
    %c0_11 = arith.constant 0 : index
    %c0_12 = arith.constant 0 : index
    %28 = vector.load %arg6[%c0_11, %c0_12] : memref<32x32xbf16, #tpu.memory_space<vmem>>, vector<32x32xbf16>
    %c0_13 = arith.constant 0 : index
    %c0_14 = arith.constant 0 : index
    %29 = vector.load %arg3[%c0_13, %c0_14] : memref<32x128xbf16, #tpu.memory_space<vmem>>, vector<32x128xbf16>
    %cst_15 = arith.constant dense<0.000000e+00> : vector<32x128xf32>
    %30 = tpu.matmul %28, %29, %cst_15 {dimension_numbers = #tpu.dot_dimension_numbers<[1], [0], [0], [1], [0, 0, 1, 1], [], []>} : vector<32x32xbf16>, vector<32x128xbf16>, vector<32x128xf32> -> vector<32x128xf32>
    %31 = arith.addf %27, %30 : vector<32x128xf32>
    %c0_16 = arith.constant 0 : index
    %c0_17 = arith.constant 0 : index
    %32 = vector.load %arg7[%c0_16, %c0_17] : memref<32x1xf32, #tpu.memory_space<vmem>>, vector<32x1xf32>
    %33 = vector.broadcast %32 : vector<32x1xf32> to vector<32x128xf32>
    %34 = vector.broadcast %13 : vector<1x128xf32> to vector<32x128xf32>
    %35 = arith.mulf %33, %34 : vector<32x128xf32>
    %36 = arith.addf %31, %35 : vector<32x128xf32>
    %c0_18 = arith.constant 0 : index
    %c0_19 = arith.constant 0 : index
    %37 = vector.load %arg8[%c0_18, %c0_19] : memref<32x1xf32, #tpu.memory_space<vmem>>, vector<32x1xf32>
    %38 = vector.broadcast %37 : vector<32x1xf32> to vector<32x128xf32>
    %39 = arith.addf %36, %38 : vector<32x128xf32>
    %cst_20 = arith.constant 0.000000e+00 : f32
    %40 = vector.broadcast %cst_20 : f32 to vector<32x128xf32>
    %41 = arith.maximumf %39, %40 : vector<32x128xf32>
    %42 = arith.truncf %41 : vector<32x128xf32> to vector<32x128xbf16>
    %c0_21 = arith.constant 0 : index
    %c0_22 = arith.constant 0 : index
    %43 = vector.load %arg9[%c0_21, %c0_22] : memref<4x32xbf16, #tpu.memory_space<vmem>>, vector<4x32xbf16>
    %cst_23 = arith.constant dense<0.000000e+00> : vector<4x128xf32>
    %44 = tpu.matmul %43, %42, %cst_23 {dimension_numbers = #tpu.dot_dimension_numbers<[1], [0], [0], [1], [0, 0, 1, 1], [], []>} : vector<4x32xbf16>, vector<32x128xbf16>, vector<4x128xf32> -> vector<4x128xf32>
    %c0_24 = arith.constant 0 : index
    %c0_25 = arith.constant 0 : index
    %45 = vector.load %arg10[%c0_24, %c0_25] : memref<4x1xf32, #tpu.memory_space<vmem>>, vector<4x1xf32>
    %46 = vector.broadcast %45 : vector<4x1xf32> to vector<4x128xf32>
    %47 = arith.addf %44, %46 : vector<4x128xf32>
    %cst_26 = arith.constant 1.000000e+00 : f32
    %48 = vector.broadcast %cst_26 : f32 to vector<1x128xf32>
    %49 = arith.subf %8, %48 : vector<1x128xf32>
    %50 = vector.broadcast %49 : vector<1x128xf32> to vector<4x128xf32>
    %51 = arith.mulf %50, %47 : vector<4x128xf32>
    %52 = arith.subf %24, %51 : vector<4x128xf32>
    %53 = vector.broadcast %10 : vector<1x128xf32> to vector<4x128xf32>
    %54 = arith.mulf %52, %53 : vector<4x128xf32>
    %55 = arith.mulf %8, %8 : vector<1x128xf32>
    %56 = arith.subf %55, %8 : vector<1x128xf32>
    %cst_27 = arith.constant 1.000000e+00 : f32
    %57 = vector.broadcast %cst_27 : f32 to vector<1x128xf32>
    %58 = arith.addf %56, %57 : vector<1x128xf32>
    %59 = arith.divf %58, %8 : vector<1x128xf32>
    %cst_28 = arith.constant 1.000000e+00 : f32
    %60 = vector.broadcast %cst_28 : f32 to vector<1x128xf32>
    %61 = arith.subf %60, %8 : vector<1x128xf32>
    %cst_29 = arith.constant 1.000000e-03 : f32
    %62 = vector.broadcast %cst_29 : f32 to vector<1x128xf32>
    %63 = arith.addf %61, %62 : vector<1x128xf32>
    %64 = arith.divf %58, %63 : vector<1x128xf32>
    %65 = arith.subf %47, %17 : vector<4x128xf32>
    %66 = math.absf %65 : vector<4x128xf32>
    %cst_30 = arith.constant 1.000000e+00 : f32
    %67 = vector.broadcast %cst_30 : f32 to vector<4x128xf32>
    %68 = arith.cmpf olt, %66, %67 : vector<4x128xf32>
    %cst_31 = arith.constant 5.000000e-01 : f32
    %69 = vector.broadcast %cst_31 : f32 to vector<4x128xf32>
    %70 = arith.mulf %69, %65 : vector<4x128xf32>
    %71 = arith.mulf %70, %65 : vector<4x128xf32>
    %cst_32 = arith.constant 5.000000e-01 : f32
    %72 = vector.broadcast %cst_32 : f32 to vector<4x128xf32>
    %73 = arith.subf %66, %72 : vector<4x128xf32>
    %74 = arith.select %68, %71, %73 : vector<4x128xi1>, vector<4x128xf32>
    %75 = vector.broadcast %59 : vector<1x128xf32> to vector<4x128xf32>
    %76 = arith.mulf %75, %74 : vector<4x128xf32>
    %77 = arith.subf %54, %15 : vector<4x128xf32>
    %78 = math.absf %77 : vector<4x128xf32>
    %cst_33 = arith.constant 1.000000e+00 : f32
    %79 = vector.broadcast %cst_33 : f32 to vector<4x128xf32>
    %80 = arith.cmpf olt, %78, %79 : vector<4x128xf32>
    %cst_34 = arith.constant 5.000000e-01 : f32
    %81 = vector.broadcast %cst_34 : f32 to vector<4x128xf32>
    %82 = arith.mulf %81, %77 : vector<4x128xf32>
    %83 = arith.mulf %82, %77 : vector<4x128xf32>
    %cst_35 = arith.constant 5.000000e-01 : f32
    %84 = vector.broadcast %cst_35 : f32 to vector<4x128xf32>
    %85 = arith.subf %78, %84 : vector<4x128xf32>
    %86 = arith.select %80, %83, %85 : vector<4x128xi1>, vector<4x128xf32>
    %87 = vector.broadcast %64 : vector<1x128xf32> to vector<4x128xf32>
    %88 = arith.mulf %87, %86 : vector<4x128xf32>
    %89 = arith.addf %76, %88 : vector<4x128xf32>
    %cst_36 = arith.constant dense<0.000000e+00> : vector<128xf32>
    %90 = vector.multi_reduction <add>, %89, %cst_36 [0] : vector<4x128xf32> to vector<128xf32>
    %91 = vector.shape_cast %90 : vector<128xf32> to vector<1x128xf32>
    %cst_37 = arith.constant 0.000000e+00 : f32
    %92 = vector.broadcast %cst_37 : f32 to vector<1x128xf32>
    %93 = arith.select %5, %91, %92 : vector<1x128xi1>, vector<1x128xf32>
    %94 = vector.shape_cast %93 : vector<1x128xf32> to vector<1x1x128xf32>
    %cst_38 = arith.constant dense<0.000000e+00> : vector<1xf32>
    %95 = vector.multi_reduction <add>, %94, %cst_38 [1, 2] : vector<1x1x128xf32> to vector<1xf32>
    %96 = vector.shape_cast %95 : vector<1xf32> to vector<1x1x1xf32>
    %97 = vector.extract %96[0, 0, 0] : f32 from vector<1x1x1xf32>
    %98 = tpu.iota {dimensions = array<i32: 1>} : vector<1x128xi32>
    %c0_i32 = arith.constant 0 : i32
    %99 = vector.broadcast %c0_i32 : i32 to vector<1x128xi32>
    %100 = arith.cmpi eq, %98, %99 : vector<1x128xi32>
    %cst_39 = arith.constant 0.000000e+00 : f32
    %101 = vector.broadcast %97 : f32 to vector<1x128xf32>
    %102 = vector.broadcast %cst_39 : f32 to vector<1x128xf32>
    %103 = arith.select %100, %101, %102 : vector<1x128xi1>, vector<1x128xf32>
    %c0_40 = arith.constant 0 : index
    %c0_41 = arith.constant 0 : index
    %104 = vector.load %arg11[%c0_40, %c0_41] : memref<1x128xf32, #tpu.memory_space<vmem>>, vector<1x128xf32>
    tpu.vector_store %arg11[%c0_40, %c0_41], %103 {strides = array<i32>} : memref<1x128xf32, #tpu.memory_space<vmem>>, vector<1x128xf32>,
    return
  }
  func.func @transform_0(%arg0: i32) -> (i32, i32) {
    %c0_i32 = arith.constant 0 : i32
    %c0_i32_0 = arith.constant 0 : i32
    return %c0_i32, %arg0 : i32, i32
  }
  func.func @transform_1(%arg0: i32) -> (i32, i32) {
    %c0_i32 = arith.constant 0 : i32
    %c0_i32_0 = arith.constant 0 : i32
    return %c0_i32, %arg0 : i32, i32
  }
  func.func @transform_2(%arg0: i32) -> (i32, i32) {
    %c0_i32 = arith.constant 0 : i32
    %c0_i32_0 = arith.constant 0 : i32
    return %c0_i32, %arg0 : i32, i32
  }
  func.func @transform_3(%arg0: i32) -> (i32, i32) {
    %c0_i32 = arith.constant 0 : i32
    %c0_i32_0 = arith.constant 0 : i32
    return %c0_i32, %arg0 : i32, i32
  }
  func.func @transform_4(%arg0: i32) -> (i32, i32) {
    %c0_i32 = arith.constant 0 : i32
    %c0_i32_0 = arith.constant 0 : i32
    %c0_i32_1 = arith.constant 0 : i32
    return %c0_i32, %c0_i32_0 : i32, i32
  }
  func.func @transform_5(%arg0: i32) -> (i32, i32) {
    %c0_i32 = arith.constant 0 : i32
    %c0_i32_0 = arith.constant 0 : i32
    %c0_i32_1 = arith.constant 0 : i32
    return %c0_i32, %c0_i32_0 : i32, i32
  }
  func.func @transform_6(%arg0: i32) -> (i32, i32) {
    %c0_i32 = arith.constant 0 : i32
    %c0_i32_0 = arith.constant 0 : i32
    %c0_i32_1 = arith.constant 0 : i32
    return %c0_i32, %c0_i32_0 : i32, i32
  }
  func.func @transform_7(%arg0: i32) -> (i32, i32) {
    %c0_i32 = arith.constant 0 : i32
    %c0_i32_0 = arith.constant 0 : i32
    %c0_i32_1 = arith.constant 0 : i32
    return %c0_i32, %c0_i32_0 : i32, i32
  }
  func.func @transform_8(%arg0: i32) -> (i32, i32) {
    %c0_i32 = arith.constant 0 : i32
    %c0_i32_0 = arith.constant 0 : i32
    %c0_i32_1 = arith.constant 0 : i32
    return %c0_i32, %c0_i32_0 : i32, i32
  }
  func.func @transform_9(%arg0: i32) -> (i32, i32) {
    %c0_i32 = arith.constant 0 : i32
    %c0_i32_0 = arith.constant 0 : i32
    %c0_i32_1 = arith.constant 0 : i32
    return %c0_i32, %c0_i32_0 : i32, i32
  }
  func.func @transform_10(%arg0: i32) -> (i32, i32) {
    %c0_i32 = arith.constant 0 : i32
    %c0_i32_0 = arith.constant 0 : i32
    return %c0_i32, %arg0 : i32, i32
  }
}

</mosaic_0001>

<llo_original>
// kernel: tpu_custom_call.1
$region0: #{tpu_custom_call.1}
  #allocation0 [shape = 'u32[]', space=smem, size = 0x4, offset = 0x4, fixed_abs, tag = 'smem constant byte address 0x4 - core index']
  #allocation1 [shape = 'u32[144,128]{1,0:T(1,128)}', space=vmem, size = 0x12000, scoped, tag = 'internal scratch']
  %s0 = inlined_call_operand.vmem [shape: f32[4,200], index: 0, kind: input, shape index: {}]
  %s1 = inlined_call_operand.vmem [shape: f32[4,200], index: 1, kind: input, shape index: {}]
  %s2 = inlined_call_operand.vmem [shape: bf16[32,200], index: 2, kind: input, shape index: {}]
  %s3 = inlined_call_operand.vmem [shape: f32[1,200], index: 3, kind: input, shape index: {}]
  %s4 = inlined_call_operand.vmem [shape: bf16[32,4], index: 4, kind: input, shape index: {}]
  %s5 = inlined_call_operand.vmem [shape: bf16[32,32], index: 5, kind: input, shape index: {}]
  %s6 = inlined_call_operand.vmem [shape: f32[32,1], index: 6, kind: input, shape index: {}]
  %s7 = inlined_call_operand.vmem [shape: f32[32,1], index: 7, kind: input, shape index: {}]
  %s8 = inlined_call_operand.vmem [shape: bf16[4,32], index: 8, kind: input, shape index: {}]
  %s9 = inlined_call_operand.vmem [shape: f32[4,1], index: 9, kind: input, shape index: {}]
  %s10 = inlined_call_operand.hbm [shape: f32[1,256], index: 10, kind: output, shape index: {}]
  %s11 = sld [smem:[#allocation0]]
  $region114: #{tpu_custom_call.1} parent=0
    _
  %s13 = ssub.s32 1, %s11
  %s14 = scalar_select 0, %s13, %s11
  $region1: #{tpu_custom_call.1} parent=0
    #allocation2 [shape = 'u8[16384]{0}', space=vmem, size = 0x4000, scoped, tag = 'input window, operand 2']
    #allocation3 [shape = 'u8[1024]{0}', space=vmem, size = 0x400, scoped, tag = 'output window, operand 0']
    #allocation4 [shape = 's32[2]{0}', space=sflag, size = 0x8, scoped, tag = 'scoped memory for tpu_custom_call.1']
    %15 = vsyncpa [#allocation4], 0
    %s16 = scalar_lea.sflag [#allocation4], 1
    %17 = vsyncpa %s16, 0
    loop: start=0, step=1, limit=4
    $region2: #{tpu_custom_call.1} parent=1 // loop_pre_header
      _
    $region3: #{tpu_custom_call.1} parent=1 // loop_header
      %s19 = sphi 0, %s23
      %p20 = scmp.ge.s32.totalorder %s19, 4
      %s29 = sphi 0, %s31
      %s32 = sphi 0, %s29
      %s33 = sphi 0, %s32
      %s49 = sphi 0, %s33
      %s55 = sphi 0, %s57
      %s58 = sphi 0, %s55
      %s59 = sphi 0, %s58
      %s75 = sphi 0, %s59
      %s81 = sphi 0, %s83
      %s84 = sphi 0, %s81
      %s85 = sphi 0, %s84
      %s101 = sphi 0, %s85
      %s107 = sphi 0, %s109
      %s110 = sphi 0, %s107
      %s111 = sphi 0, %s110
      %s127 = sphi 0, %s111
      %s131 = sphi 0, %s131
      %s133 = sphi 0, %s131
      %s134 = sphi 0, %s133
      %s148 = sphi 0, %s134
      %s152 = sphi 0, %s152
      %s154 = sphi 0, %s152
      %s155 = sphi 0, %s154
      %s169 = sphi 0, %s155
      %s173 = sphi 0, %s173
      %s175 = sphi 0, %s173
      %s176 = sphi 0, %s175
      %s190 = sphi 0, %s176
      %s194 = sphi 0, %s194
      %s196 = sphi 0, %s194
      %s197 = sphi 0, %s196
      %s211 = sphi 0, %s197
      %s215 = sphi 0, %s215
      %s217 = sphi 0, %s215
      %s218 = sphi 0, %s217
      %s232 = sphi 0, %s218
      %s236 = sphi 0, %s236
      %s238 = sphi 0, %s236
      %s239 = sphi 0, %s238
      %s253 = sphi 0, %s239
      %s259 = sphi 0, %s261
      %s262 = sphi 0, %s259
      %s263 = sphi 0, %s262
      %s279 = sphi 0, %s263
    $region4: #{tpu_custom_call.1} parent=1 // loop_header_branch
      %22 = sbr.rel (%p20) target = $region8
    $region5: #{tpu_custom_call.1} parent=1 // loop_body
      %s24 = ssub.s32 %s19, 1
      %s25 = ssub.s32 %s19, 2
      %s26 = sadd.s32 %s19, 1
      %s27 = ssub.s32 %s19, %s26
      %p28 = scmp.eq.s32.totalorder %s27, 0
      %s30 = sadd.s32 %s29, 1
      %s31 = scalar_select %p28, %s29, %s30
      %p34 = pneg %p28
      %p35 = scmp.eq.s32.totalorder %s19, 1
      %p36 = por %p34, %p35
      %p37 = scmp.ne.s32.totalorder %s29, %s32
      %p38 = scmp.eq.s32.totalorder %s19, 0
      %p39 = por %p37, %p38
      %p40 = scmp.ne.s32.totalorder %s29, %s32
      %p41 = scmp.eq.s32.totalorder %s24, 1
      %p42 = por %p40, %p41
      %p43 = scmp.ne.s32.totalorder %s32, %s33
      %p44 = scmp.eq.s32.totalorder %s24, 0
      %p45 = por %p43, %p44
      %p46 = scmp.ne.s32.totalorder %s32, %s33
      %p47 = scmp.eq.s32.totalorder %s25, 1
      %p48 = por %p46, %p47
      %p50 = scmp.ne.s32.totalorder %s33, %s49
      %p51 = scmp.eq.s32.totalorder %s25, 0
      %p52 = por %p50, %p51
      %s53 = ssub.s32 %s19, %s26
      %p54 = scmp.eq.s32.totalorder %s53, 0
      %s56 = sadd.s32 %s55, 1
      %s57 = scalar_select %p54, %s55, %s56
      %p60 = pneg %p54
      %p61 = scmp.eq.s32.totalorder %s19, 1
      %p62 = por %p60, %p61
      %p63 = scmp.ne.s32.totalorder %s55, %s58
      %p64 = scmp.eq.s32.totalorder %s19, 0
      %p65 = por %p63, %p64
      %p66 = scmp.ne.s32.totalorder %s55, %s58
      %p67 = scmp.eq.s32.totalorder %s24, 1
      %p68 = por %p66, %p67
      %p69 = scmp.ne.s32.totalorder %s58, %s59
      %p70 = scmp.eq.s32.totalorder %s24, 0
      %p71 = por %p69, %p70
      %p72 = scmp.ne.s32.totalorder %s58, %s59
      %p73 = scmp.eq.s32.totalorder %s25, 1
      %p74 = por %p72, %p73
      %p76 = scmp.ne.s32.totalorder %s59, %s75
      %p77 = scmp.eq.s32.totalorder %s25, 0
      %p78 = por %p76, %p77
      %s79 = ssub.s32 %s19, %s26
      %p80 = scmp.eq.s32.totalorder %s79, 0
      %s82 = sadd.s32 %s81, 1
      %s83 = scalar_select %p80, %s81, %s82
      %p86 = pneg %p80
      %p87 = scmp.eq.s32.totalorder %s19, 1
      %p88 = por %p86, %p87
      %p89 = scmp.ne.s32.totalorder %s81, %s84
      %p90 = scmp.eq.s32.totalorder %s19, 0
      %p91 = por %p89, %p90
      %p92 = scmp.ne.s32.totalorder %s81, %s84
      %p93 = scmp.eq.s32.totalorder %s24, 1
      %p94 = por %p92, %p93
      %p95 = scmp.ne.s32.totalorder %s84, %s85
      %p96 = scmp.eq.s32.totalorder %s24, 0
      %p97 = por %p95, %p96
      %p98 = scmp.ne.s32.totalorder %s84, %s85
      %p99 = scmp.eq.s32.totalorder %s25, 1
      %p100 = por %p98, %p99
      %p102 = scmp.ne.s32.totalorder %s85, %s101
      %p103 = scmp.eq.s32.totalorder %s25, 0
      %p104 = por %p102, %p103
      %s105 = ssub.s32 %s19, %s26
      %p106 = scmp.eq.s32.totalorder %s105, 0
      %s108 = sadd.s32 %s107, 1
      %s109 = scalar_select %p106, %s107, %s108
      %p112 = pneg %p106
      %p113 = scmp.eq.s32.totalorder %s19, 1
      %p114 = por %p112, %p113
      %p115 = scmp.ne.s32.totalorder %s107, %s110
      %p116 = scmp.eq.s32.totalorder %s19, 0
      %p117 = por %p115, %p116
      %p118 = scmp.ne.s32.totalorder %s107, %s110
      %p119 = scmp.eq.s32.totalorder %s24, 1
      %p120 = por %p118, %p119
      %p121 = scmp.ne.s32.totalorder %s110, %s111
      %p122 = scmp.eq.s32.totalorder %s24, 0
      %p123 = por %p121, %p122
      %p124 = scmp.ne.s32.totalorder %s110, %s111
      %p125 = scmp.eq.s32.totalorder %s25, 1
      %p126 = por %p124, %p125
      %p128 = scmp.ne.s32.totalorder %s111, %s127
      %p129 = scmp.eq.s32.totalorder %s25, 0
      %p130 = por %p128, %p129
      %s132 = sadd.s32 %s131, 1
      %p135 = scmp.eq.s32.totalorder %s19, 1
      %p136 = scmp.ne.s32.totalorder %s131, %s133
      %p137 = scmp.eq.s32.totalorder %s19, 0
      %p138 = por %p136, %p137
      %p139 = scmp.ne.s32.totalorder %s131, %s133
      %p140 = scmp.eq.s32.totalorder %s24, 1
      %p141 = por %p139, %p140
      %p142 = scmp.ne.s32.totalorder %s133, %s134
      %p143 = scmp.eq.s32.totalorder %s24, 0
      %p144 = por %p142, %p143
      %p145 = scmp.ne.s32.totalorder %s133, %s134
      %p146 = scmp.eq.s32.totalorder %s25, 1
      %p147 = por %p145, %p146
      %p149 = scmp.ne.s32.totalorder %s134, %s148
      %p150 = scmp.eq.s32.totalorder %s25, 0
      %p151 = por %p149, %p150
      %s153 = sadd.s32 %s152, 1
      %p156 = scmp.eq.s32.totalorder %s19, 1
      %p157 = scmp.ne.s32.totalorder %s152, %s154
      %p158 = scmp.eq.s32.totalorder %s19, 0
      %p159 = por %p157, %p158
      %p160 = scmp.ne.s32.totalorder %s152, %s154
      %p161 = scmp.eq.s32.totalorder %s24, 1
      %p162 = por %p160, %p161
      %p163 = scmp.ne.s32.totalorder %s154, %s155
      %p164 = scmp.eq.s32.totalorder %s24, 0
      %p165 = por %p163, %p164
      %p166 = scmp.ne.s32.totalorder %s154, %s155
      %p167 = scmp.eq.s32.totalorder %s25, 1
      %p168 = por %p166, %p167
      %p170 = scmp.ne.s32.totalorder %s155, %s169
      %p171 = scmp.eq.s32.totalorder %s25, 0
      %p172 = por %p170, %p171
      %s174 = sadd.s32 %s173, 1
      %p177 = scmp.eq.s32.totalorder %s19, 1
      %p178 = scmp.ne.s32.totalorder %s173, %s175
      %p179 = scmp.eq.s32.totalorder %s19, 0
      %p180 = por %p178, %p179
      %p181 = scmp.ne.s32.totalorder %s173, %s175
      %p182 = scmp.eq.s32.totalorder %s24, 1
      %p183 = por %p181, %p182
      %p184 = scmp.ne.s32.totalorder %s175, %s176
      %p185 = scmp.eq.s32.totalorder %s24, 0
      %p186 = por %p184, %p185
      %p187 = scmp.ne.s32.totalorder %s175, %s176
      %p188 = scmp.eq.s32.totalorder %s25, 1
      %p189 = por %p187, %p188
      %p191 = scmp.ne.s32.totalorder %s176, %s190
      %p192 = scmp.eq.s32.totalorder %s25, 0
      %p193 = por %p191, %p192
      %s195 = sadd.s32 %s194, 1
      %p198 = scmp.eq.s32.totalorder %s19, 1
      %p199 = scmp.ne.s32.totalorder %s194, %s196
      %p200 = scmp.eq.s32.totalorder %s19, 0
      %p201 = por %p199, %p200
      %p202 = scmp.ne.s32.totalorder %s194, %s196
      %p203 = scmp.eq.s32.totalorder %s24, 1
      %p204 = por %p202, %p203
      %p205 = scmp.ne.s32.totalorder %s196, %s197
      %p206 = scmp.eq.s32.totalorder %s24, 0
      %p207 = por %p205, %p206
      %p208 = scmp.ne.s32.totalorder %s196, %s197
      %p209 = scmp.eq.s32.totalorder %s25, 1
      %p210 = por %p208, %p209
      %p212 = scmp.ne.s32.totalorder %s197, %s211
      %p213 = scmp.eq.s32.totalorder %s25, 0
      %p214 = por %p212, %p213
      %s216 = sadd.s32 %s215, 1
      %p219 = scmp.eq.s32.totalorder %s19, 1
      %p220 = scmp.ne.s32.totalorder %s215, %s217
      %p221 = scmp.eq.s32.totalorder %s19, 0
      %p222 = por %p220, %p221
      %p223 = scmp.ne.s32.totalorder %s215, %s217
      %p224 = scmp.eq.s32.totalorder %s24, 1
      %p225 = por %p223, %p224
      %p226 = scmp.ne.s32.totalorder %s217, %s218
      %p227 = scmp.eq.s32.totalorder %s24, 0
      %p228 = por %p226, %p227
      %p229 = scmp.ne.s32.totalorder %s217, %s218
      %p230 = scmp.eq.s32.totalorder %s25, 1
      %p231 = por %p229, %p230
      %p233 = scmp.ne.s32.totalorder %s218, %s232
      %p234 = scmp.eq.s32.totalorder %s25, 0
      %p235 = por %p233, %p234
      %s237 = sadd.s32 %s236, 1
      %p240 = scmp.eq.s32.totalorder %s19, 1
      %p241 = scmp.ne.s32.totalorder %s236, %s238
      %p242 = scmp.eq.s32.totalorder %s19, 0
      %p243 = por %p241, %p242
      %p244 = scmp.ne.s32.totalorder %s236, %s238
      %p245 = scmp.eq.s32.totalorder %s24, 1
      %p246 = por %p244, %p245
      %p247 = scmp.ne.s32.totalorder %s238, %s239
      %p248 = scmp.eq.s32.totalorder %s24, 0
      %p249 = por %p247, %p248
      %p250 = scmp.ne.s32.totalorder %s238, %s239
      %p251 = scmp.eq.s32.totalorder %s25, 1
      %p252 = por %p250, %p251
      %p254 = scmp.ne.s32.totalorder %s239, %s253
      %p255 = scmp.eq.s32.totalorder %s25, 0
      %p256 = por %p254, %p255
      %s257 = ssub.s32 %s19, %s26
      %p258 = scmp.eq.s32.totalorder %s257, 0
      %s260 = sadd.s32 %s259, 1
      %s261 = scalar_select %p258, %s259, %s260
      %p264 = pneg %p258
      %p265 = scmp.eq.s32.totalorder %s19, 1
      %p266 = por %p264, %p265
      %p267 = scmp.ne.s32.totalorder %s259, %s262
      %p268 = scmp.eq.s32.totalorder %s19, 0
      %p269 = por %p267, %p268
      %p270 = scmp.ne.s32.totalorder %s259, %s262
      %p271 = scmp.eq.s32.totalorder %s24, 1
      %p272 = por %p270, %p271
      %p273 = scmp.ne.s32.totalorder %s262, %s263
      %p274 = scmp.eq.s32.totalorder %s24, 0
      %p275 = por %p273, %p274
      %p276 = scmp.ne.s32.totalorder %s262, %s263
      %p277 = scmp.eq.s32.totalorder %s25, 1
      %p278 = por %p276, %p277
      %p280 = scmp.ne.s32.totalorder %s263, %s279
      %p281 = scmp.eq.s32.totalorder %s25, 0
      %p282 = por %p280, %p281
      %p283 = scmp.le.s32.totalorder 1, %s19
      %p284 = scmp.lt.s32.totalorder %s19, 3
      %p285 = pnand %p283, %p284
      %p286 = pneg %p285
      // Predicated region
      $region9: #{tpu_custom_call.1} parent=5 // pred_check
        _
      $region10: #{tpu_custom_call.1} parent=5 // pred_check_branch
        %288 = sbr.rel (%p285) target = $region12
      $region11: #{tpu_custom_call.1} parent=5 // pred_region
        %s289 = ssub.s32 %s19, 1
        // Predicated region
        $region13: #{tpu_custom_call.1} parent=11 // pred_check
          %p290 = pneg %p144
        $region14: #{tpu_custom_call.1} parent=11 // pred_check_branch
          %292 = sbr.rel (%p290) target = $region16
        $region15: #{tpu_custom_call.1} parent=11 // pred_region
          _
        $region16: #{tpu_custom_call.1} parent=11 // pred_fallthru
          _
        // Predicated region
        $region17: #{tpu_custom_call.1} parent=11 // pred_check
          %p293 = pneg %p165
        $region18: #{tpu_custom_call.1} parent=11 // pred_check_branch
          %295 = sbr.rel (%p293) target = $region20
        $region19: #{tpu_custom_call.1} parent=11 // pred_region
          _
        $region20: #{tpu_custom_call.1} parent=11 // pred_fallthru
          _
        // Predicated region
        $region21: #{tpu_custom_call.1} parent=11 // pred_check
          %p296 = pneg %p186
        $region22: #{tpu_custom_call.1} parent=11 // pred_check_branch
          %298 = sbr.rel (%p296) target = $region24
        $region23: #{tpu_custom_call.1} parent=11 // pred_region
          _
        $region24: #{tpu_custom_call.1} parent=11 // pred_fallthru
          _
        // Predicated region
        $region25: #{tpu_custom_call.1} parent=11 // pred_check
          %p299 = pneg %p207
        $region26: #{tpu_custom_call.1} parent=11 // pred_check_branch
          %301 = sbr.rel (%p299) target = $region28
        $region27: #{tpu_custom_call.1} parent=11 // pred_region
          _
        $region28: #{tpu_custom_call.1} parent=11 // pred_fallthru
          _
        // Predicated region
        $region29: #{tpu_custom_call.1} parent=11 // pred_check
          %p302 = pneg %p228
        $region30: #{tpu_custom_call.1} parent=11 // pred_check_branch
          %304 = sbr.rel (%p302) target = $region32
        $region31: #{tpu_custom_call.1} parent=11 // pred_region
          _
        $region32: #{tpu_custom_call.1} parent=11 // pred_fallthru
          _
        // Predicated region
        $region33: #{tpu_custom_call.1} parent=11 // pred_check
          %p305 = pneg %p249
        $region34: #{tpu_custom_call.1} parent=11 // pred_check_branch
          %307 = sbr.rel (%p305) target = $region36
        $region35: #{tpu_custom_call.1} parent=11 // pred_region
          _
        $region36: #{tpu_custom_call.1} parent=11 // pred_fallthru
          _
      $region12: #{tpu_custom_call.1} parent=5 // pred_fallthru
        _
      %p308 = scmp.lt.s32.totalorder %s19, 2
      // Predicated region
      $region37: #{tpu_custom_call.1} parent=5 // pred_check
        %p309 = pneg %p308
      $region38: #{tpu_custom_call.1} parent=5 // pred_check_branch
        %311 = sbr.rel (%p309) target = $region40
      $region39: #{tpu_custom_call.1} parent=5 // pred_region
        // Predicated region
        $region41: #{tpu_custom_call.1} parent=39 // pred_check
          %p312 = pneg %p39
        $region42: #{tpu_custom_call.1} parent=39 // pred_check_branch
          %314 = sbr.rel (%p312) target = $region44
        $region43: #{tpu_custom_call.1} parent=39 // pred_region
          %p315 = scmp.lt.s32.totalorder %s19, 1
          %s316 = scalar_select %p315, %s19, 1
          %s317 = smul.addr %s316, 4
          %s318 = scalar_lea.vmem %s0, %s317
        $region44: #{tpu_custom_call.1} parent=39 // pred_fallthru
          _
        // Predicated region
        $region45: #{tpu_custom_call.1} parent=39 // pred_check
          %p319 = pneg %p65
        $region46: #{tpu_custom_call.1} parent=39 // pred_check_branch
          %321 = sbr.rel (%p319) target = $region48
        $region47: #{tpu_custom_call.1} parent=39 // pred_region
          %p322 = scmp.lt.s32.totalorder %s19, 1
          %s323 = scalar_select %p322, %s19, 1
          %s324 = smul.addr %s323, 4
          %s325 = scalar_lea.vmem %s1, %s324
        $region48: #{tpu_custom_call.1} parent=39 // pred_fallthru
          _
        // Predicated region
        $region49: #{tpu_custom_call.1} parent=39 // pred_check
          %p326 = pneg %p91
        $region50: #{tpu_custom_call.1} parent=39 // pred_check_branch
          %328 = sbr.rel (%p326) target = $region52
        $region51: #{tpu_custom_call.1} parent=39 // pred_region
          %s329 = sand.u32 %s81, 1
          %s330 = sand.u32 %s81, 1
          %s331 = smul.addr %s330, 16
          %s332 = scalar_lea.vmem [#allocation2], %s331
          %s333 = smul.addr %s19, 4
          %s334 = scalar_lea.vmem %s2, %s333
          // Predicated region
          $region53: #{tpu_custom_call.1} parent=51 // pred_check
            _
          $region54: #{tpu_custom_call.1} parent=51 // pred_check_branch
            %336 = sbr.rel (0) target = $region56
          $region55: #{tpu_custom_call.1} parent=51 // pred_region
            // Predicated region
            $region57: #{tpu_custom_call.1} parent=55 // pred_check
              _
            $region58: #{tpu_custom_call.1} parent=55 // pred_check_branch
              %338 = sbr.rel target = $region60
            $region59: #{tpu_custom_call.1} parent=55 // pred_region
              // Predicated region
              $region72: #{tpu_custom_call.1} parent=59 // pred_check
                _
              $region73: #{tpu_custom_call.1} parent=59 // pred_check_branch
                %359 = sbr.rel (0) target = $region75
              $region74: #{tpu_custom_call.1} parent=59 // pred_region
                loop: start=0, step=1, limit=1
                $region76: #{tpu_custom_call.1} parent=74 // loop_pre_header
                  _
                $region77: #{tpu_custom_call.1} parent=74 // loop_header
                  %s361 = sphi 0, %s365
                  %p362 = scmp.ge.s32.totalorder %s361, 1
                  %s366 = sphi %s334, %s334
                  %s367 = sphi %s332, %s332
                $region78: #{tpu_custom_call.1} parent=74 // loop_header_branch
                  %364 = sbr.rel (%p362) target = $region82
                $region79: #{tpu_custom_call.1} parent=74 // loop_body
                  _
                $region80: #{tpu_custom_call.1} parent=74 // loop_footer
                  %s365 = sadd.s32 1, %s361
                $region81: #{tpu_custom_call.1} parent=74 // loop_footer_branch
                  %360 = sbr.rel target = $region77
                $region82: #{tpu_custom_call.1} parent=74 // loop_exit
                  _
                loop: start=0, step=1, limit=1
                $region83: #{tpu_custom_call.1} parent=74 // loop_pre_header
                  _
                $region84: #{tpu_custom_call.1} parent=74 // loop_header
                  %s370 = sphi 0, %s374
                  %p371 = scmp.ge.s32.totalorder %s370, 1
                  %s375 = sphi %s334, %s334
                  %s376 = sphi %s332, %s332
                $region85: #{tpu_custom_call.1} parent=74 // loop_header_branch
                  %373 = sbr.rel (%p371) target = $region89
                $region86: #{tpu_custom_call.1} parent=74 // loop_body
                  %v377 = vld [vmem:[%s375] sm:$0xf]
                  %378 = vst [vmem:[%s376] sm:$0xf] %v377
                  %v379 = vld [vmem:[%s375 + $0x8] sm:$0xf]
                  %380 = vst [vmem:[%s376 + $0x4] sm:$0xf] %v379
                  %v381 = vld [vmem:[%s375 + $0x10] sm:$0xf]
                  %382 = vst [vmem:[%s376 + $0x8] sm:$0xf] %v381
                  %v383 = vld [vmem:[%s375 + $0x18] sm:$0xf]
                  %384 = vst [vmem:[%s376 + $0xc] sm:$0xf] %v383
                $region87: #{tpu_custom_call.1} parent=74 // loop_footer
                  %s374 = sadd.s32 1, %s370
                $region88: #{tpu_custom_call.1} parent=74 // loop_footer_branch
                  %369 = sbr.rel target = $region84
                $region89: #{tpu_custom_call.1} parent=74 // loop_exit
                  _
              $region75: #{tpu_custom_call.1} parent=59 // pred_fallthru
                _
            $region60: #{tpu_custom_call.1} parent=55 // pred_fallthru
              _
            // Predicated region
            $region61: #{tpu_custom_call.1} parent=55 // pred_check
              _
            $region62: #{tpu_custom_call.1} parent=55 // pred_check_branch
              %340 = sbr.rel (0) target = $region64
            $region63: #{tpu_custom_call.1} parent=55 // pred_region
              loop: start=0, step=1, limit=1
              $region65: #{tpu_custom_call.1} parent=63 // loop_pre_header
                _
              $region66: #{tpu_custom_call.1} parent=63 // loop_header
                %s343 = sphi 0, %s347
                %p344 = scmp.ge.s32.totalorder %s343, 1
                %s348 = sphi %s334, %s334
                %s349 = sphi %s332, %s332
              $region67: #{tpu_custom_call.1} parent=63 // loop_header_branch
                %346 = sbr.rel (%p344) target = $region71
              $region68: #{tpu_custom_call.1} parent=63 // loop_body
                %v350 = vld [vmem:[%s348] sm:$0xf]
                %351 = vst [vmem:[%s349] sm:$0xf] %v350
                %v352 = vld [vmem:[%s348 + $0x8] sm:$0xf]
                %353 = vst [vmem:[%s349 + $0x4] sm:$0xf] %v352
                %v354 = vld [vmem:[%s348 + $0x10] sm:$0xf]
                %355 = vst [vmem:[%s349 + $0x8] sm:$0xf] %v354
                %v356 = vld [vmem:[%s348 + $0x18] sm:$0xf]
                %357 = vst [vmem:[%s349 + $0xc] sm:$0xf] %v356
              $region69: #{tpu_custom_call.1} parent=63 // loop_footer
                %s347 = sadd.s32 1, %s343
              $region70: #{tpu_custom_call.1} parent=63 // loop_footer_branch
                %342 = sbr.rel target = $region66
              $region71: #{tpu_custom_call.1} parent=63 // loop_exit
                _
            $region64: #{tpu_custom_call.1} parent=55 // pred_fallthru
              _
          $region56: #{tpu_custom_call.1} parent=51 // pred_fallthru
            _
          %385 = vnop
        $region52: #{tpu_custom_call.1} parent=39 // pred_fallthru
          _
        // Predicated region
        $region90: #{tpu_custom_call.1} parent=39 // pred_check
          %p386 = pneg %p117
        $region91: #{tpu_custom_call.1} parent=39 // pred_check_branch
          %388 = sbr.rel (%p386) target = $region93
        $region92: #{tpu_custom_call.1} parent=39 // pred_region
          %p389 = scmp.lt.s32.totalorder %s19, 1
          %s390 = scalar_select %p389, %s19, 1
          %s391 = scalar_lea.vmem %s3, %s390
        $region93: #{tpu_custom_call.1} parent=39 // pred_fallthru
          _
      $region40: #{tpu_custom_call.1} parent=5 // pred_fallthru
        _
      %p392 = scmp.le.s32.totalorder 1, %s19
      %p393 = scmp.lt.s32.totalorder %s19, 3
      %p394 = pnand %p392, %p393
      %p395 = pneg %p394
      // Predicated region
      $region94: #{tpu_custom_call.1} parent=5 // pred_check
        _
      $region95: #{tpu_custom_call.1} parent=5 // pred_check_branch
        %397 = sbr.rel (%p394) target = $region97
      $region96: #{tpu_custom_call.1} parent=5 // pred_region
        %s398 = ssub.s32 %s19, 1
        %s399 = sand.u32 %s84, 1
        %s400 = sand.u32 %s84, 1
        %s401 = smul.addr %s400, 16
        %s402 = scalar_lea.vmem [#allocation2], %s401
        // Predicated region
        $region98: #{tpu_custom_call.1} parent=96 // pred_check
          %p403 = pneg %p97
        $region99: #{tpu_custom_call.1} parent=96 // pred_check_branch
          %405 = sbr.rel (%p403) target = $region101
        $region100: #{tpu_custom_call.1} parent=96 // pred_region
          _
        $region101: #{tpu_custom_call.1} parent=96 // pred_fallthru
          _
        %p406 = scmp.lt.s32.totalorder %s24, 1
        %s407 = scalar_select %p406, %s24, 1
        %s408 = smul.addr %s407, 4
        %s409 = scalar_lea.vmem %s0, %s408
        %p410 = pneg %p45
        %p411 = pneg %p42
        %p412 = scmp.lt.s32.totalorder %s24, 1
        %s413 = scalar_select %p412, %s24, 1
        %s414 = smul.addr %s413, 4
        %s415 = scalar_lea.vmem %s1, %s414
        %p416 = pneg %p71
        %p417 = pneg %p68
        %s418 = sand.u32 %s84, 1
        %s419 = sand.u32 %s84, 1
        %s420 = smul.addr %s419, 16
        %s421 = scalar_lea.vmem [#allocation2], %s420
        %p422 = pneg %p97
        %p423 = pneg %p94
        %p424 = scmp.lt.s32.totalorder %s24, 1
        %s425 = scalar_select %p424, %s24, 1
        %s426 = scalar_lea.vmem %s3, %s425
        %p427 = pneg %p123
        %p428 = pneg %p120
        %p429 = pneg %p144
        %p430 = pneg %p141
        %p431 = pneg %p165
        %p432 = pneg %p162
        %p433 = pneg %p186
        %p434 = pneg %p183
        %p435 = pneg %p207
        %p436 = pneg %p204
        %p437 = pneg %p228
        %p438 = pneg %p225
        %p439 = pneg %p249
        %p440 = pneg %p246
        %p441 = pneg %p275
        %p442 = pneg %p272
        %s443 = sand.u32 %s262, 1
        %s444 = scalar_lea.sflag [#allocation4], %s443
        %s445 = sand.u32 %s262, 1
        %s446 = scalar_lea.vmem [#allocation3], %s445
        %p447 = scmp.lt.s32.totalorder %s24, 1
        %s448 = scalar_select %p447, %s24, 1
        %s449 = smul.addr %s448, 4
        %s450 = scalar_lea.vmem %s0, %s449
        %p451 = scmp.lt.s32.totalorder %s24, 1
        %s452 = scalar_select %p451, %s24, 1
        %s453 = smul.addr %s452, 4
        %s454 = scalar_lea.vmem %s1, %s453
        %p455 = scmp.lt.s32.totalorder %s24, 1
        %s456 = scalar_select %p455, %s24, 1
        %s457 = scalar_lea.vmem %s3, %s456
        %v459 = vlaneseq
        %v460 = vand.u32 %v459, 127
        %s461 = smul.u32 %s24, 128
        %v462 = vstv %s461
        %v463 = vadd.s32 %v462, %v460
        %vm464 = vcmp.lt.s32.totalorder %v463, 200
        %v465 = vld [vmem:[%s457] sm:$0x1]
        %v466 = vsel %vm464, %v465, 1.0
        %v467 = vrsqrt.pop %v466
        %v468 = vmul.f32 %v466, %v467
        %vm469 = vcmp.eq.f32.partialorder %v466, inf
        %v470 = vsel %vm469, %v466, %v468
        %vm471 = vcmp.eq.f32.partialorder %v466, 0.0
        %v472 = vand.u32 %v466, 2147483648
        %v473 = vsel %vm471, %v472, %v470
        %v474 = vrsqrt.pop %v466
        %v475 = vlog2.pop %v466
        %v476 = vmul.f32 %v475, 0.6931472
        %v477 = vmul.f32 %v476, 0.25
        %v478 = vld [vmem:[%s450] sm:$0xf]
        %v479 = vld [vmem:[%s454] sm:$0xf]
        %v480 = vsub.f32 0.0, %v478
        %v481 = vsub.f32 1.0, %v466
        %v482 = vlaneseq
        %v483 = vshrl.u32 %v482, 7
        %v484 = vsub.s32 0, %v483
        %v485 = vrot.slane %v481, %v484
        %v486 = vmul.f32 %v478, %v485
        %v487 = vlaneseq
        %v488 = vshrl.u32 %v487, 7
        %v489 = vsub.s32 0, %v488
        %v490 = vrot.slane %v473, %v489
        %v491 = vmul.f32 %v490, %v479
        %v492 = vadd.f32 %v486, %v491
        %v493 = vld [vmem:[%s4] sm:$0xf]
        %v494 = vld [vmem:[%s4 + $0x4] sm:$0xf]
        %v495 = vld [vmem:[%s4 + $0x8] sm:$0xf]
        %v496 = vld [vmem:[%s4 + $0xc] sm:$0xf]
        %v497 = vpack.c.bf16 %v492, %v492
        %v498 = vld [vmem:[%s5] sm:$0xf]
        %v499 = vld [vmem:[%s5 + $0x4] sm:$0xf]
        %v500 = vld [vmem:[%s5 + $0x8] sm:$0xf]
        %v501 = vld [vmem:[%s5 + $0xc] sm:$0xf]
        %v502 = vld [vmem:[%s402] sm:$0xf]
        %v503 = vld [vmem:[%s402 + $0x4] sm:$0xf]
        %v504 = vld [vmem:[%s402 + $0x8] sm:$0xf]
        %v505 = vld [vmem:[%s402 + $0xc] sm:$0xf]
        %v510 = vunpack.c.l.b16 %v498
        %v511 = vunpack.c.l.b16 %v499
        %v512 = vunpack.c.l.b16 %v500
        %v513 = vunpack.c.l.b16 %v501
        %v514 = vpack.c.b16 %v511, %v510
        %v515 = vpack.c.b16 %v513, %v512
        %v520 = vunpack.c.l.b16 %v502
        %v521 = vunpack.c.l.b16 %v503
        %v522 = vunpack.c.l.b16 %v504
        %v523 = vunpack.c.l.b16 %v505
        %v524 = vpack.c.b16 %v521, %v520
        %v525 = vpack.c.b16 %v523, %v522
        %vm528 = vcmask 261120
        %v530 = vsel %vm528, %v514, 0
        %v533 = vsel %vm528, %v515, 0
        %535 = vmatprep.subr.bf16.mxu0 0
        %536 = vmatpush1.bf16.msra.mxu0 %v524
        %537 = vmatprep.subr.bf16.mxu0 0
        %538 = vmatpush1.bf16.msra.mxu0 %v525
        %539 = vmatprep.subr.bf16.mxu0 0
        %540 = vmatpush1.bf16.msra.mxu0 0
        %541 = vmatprep.subr.bf16.mxu0 0
        %542 = vmatpush1.bf16.msra.mxu0 0
        %543 = vmatprep.subr.bf16.mxu0 0
        %544 = vmatpush1.bf16.msra.mxu0 0
        %545 = vmatprep.subr.bf16.mxu0 0
        %546 = vmatpush1.bf16.msra.mxu0 0
        %547 = vmatprep.subr.bf16.mxu0 0
        %548 = vmatpush1.bf16.msra.mxu0 0
        %549 = vmatprep.subr.bf16.mxu0 0
        %550 = vmatpush1.bf16.msra.mxu0 0
        %551 = vmatprep.subr.bf16.mxu0 0
        %552 = vmatpush1.bf16.msra.mxu0 0
        %553 = vmatprep.subr.bf16.mxu0 0
        %554 = vmatpush1.bf16.msra.mxu0 0
        %555 = vmatprep.subr.bf16.mxu0 0
        %556 = vmatpush1.bf16.msra.mxu0 0
        %557 = vmatprep.subr.bf16.mxu0 0
        %558 = vmatpush1.bf16.msra.mxu0 0
        %559 = vmatprep.subr.bf16.mxu0 0
        %560 = vmatpush1.bf16.msra.mxu0 0
        %561 = vmatprep.subr.bf16.mxu0 0
        %562 = vmatpush1.bf16.msra.mxu0 0
        %563 = vmatprep.subr.bf16.mxu0 0
        %564 = vmatpush1.bf16.msra.mxu0 0
        %565 = vmatprep.subr.bf16.mxu0 0
        %566 = vmatpush1.bf16.msra.mxu0 0
        %567 = vmatprep.mubr.bf16.mxu0 0
        %568 = vmatmul.mubr.bf16.gmra.mrb[0].mxu0 %v530
        %v569 = vpop.f32.mrb[0].mxu0
        %v570 = vadd.f32 0.0, %v569
        %v571 = vpop.f32.mrb[0].mxu0
        %v572 = vpop.f32.mrb[0].mxu0
        %v573 = vadd.f32 0.0, %v572
        %v574 = vpop.f32.mrb[0].mxu0
        %575 = vmatprep.mubr.bf16.mxu0 0
        %576 = vmatmul.mubr.bf16.gmra.mrb[0].mxu0 %v533
        %v577 = vpop.f32.mrb[0].mxu0
        %v578 = vadd.f32 0.0, %v577
        %v579 = vpop.f32.mrb[0].mxu0
        %v580 = vpop.f32.mrb[0].mxu0
        %v581 = vadd.f32 0.0, %v580
        %v582 = vpop.f32.mrb[0].mxu0
        %583 = vdwg.mxu0
        %v588 = vunpack.c.l.b16 %v493
        %v589 = vunpack.c.l.b16 %v494
        %v590 = vunpack.c.l.b16 %v495
        %v591 = vunpack.c.l.b16 %v496
        %v592 = vpack.c.b16 %v589, %v588
        %v593 = vpack.c.b16 %v591, %v590
        %vm594 = vcmask 31744
        %v596 = vsel %vm594, %v592, 0
        %v599 = vsel %vm594, %v593, 0
        %vm601 = vcmask 1041408
        %v603 = vsel %vm601, %v497, 0
        %605 = vmatprep.subr.bf16.mxu0 0
        %606 = vmatpush1.bf16.msra.mxu0 %v603
        %607 = vmatprep.subr.bf16.mxu0 0
        %608 = vmatpush1.bf16.msra.mxu0 0
        %609 = vmatprep.subr.bf16.mxu0 0
        %610 = vmatpush1.bf16.msra.mxu0 0
        %611 = vmatprep.subr.bf16.mxu0 0
        %612 = vmatpush1.bf16.msra.mxu0 0
        %613 = vmatprep.subr.bf16.mxu0 0
        %614 = vmatpush1.bf16.msra.mxu0 0
        %615 = vmatprep.subr.bf16.mxu0 0
        %616 = vmatpush1.bf16.msra.mxu0 0
        %617 = vmatprep.subr.bf16.mxu0 0
        %618 = vmatpush1.bf16.msra.mxu0 0
        %619 = vmatprep.subr.bf16.mxu0 0
        %620 = vmatpush1.bf16.msra.mxu0 0
        %621 = vmatprep.subr.bf16.mxu0 0
        %622 = vmatpush1.bf16.msra.mxu0 0
        %623 = vmatprep.subr.bf16.mxu0 0
        %624 = vmatpush1.bf16.msra.mxu0 0
        %625 = vmatprep.subr.bf16.mxu0 0
        %626 = vmatpush1.bf16.msra.mxu0 0
        %627 = vmatprep.subr.bf16.mxu0 0
        %628 = vmatpush1.bf16.msra.mxu0 0
        %629 = vmatprep.subr.bf16.mxu0 0
        %630 = vmatpush1.bf16.msra.mxu0 0
        %631 = vmatprep.subr.bf16.mxu0 0
        %632 = vmatpush1.bf16.msra.mxu0 0
        %633 = vmatprep.subr.bf16.mxu0 0
        %634 = vmatpush1.bf16.msra.mxu0 0
        %635 = vmatprep.subr.bf16.mxu0 0
        %636 = vmatpush1.bf16.msra.mxu0 0
        %637 = vmatprep.mubr.bf16.mxu0 0
        %638 = vmatmul.mubr.bf16.gmra.mrb[0].mxu0 %v596
        %v639 = vpop.f32.mrb[0].mxu0
        %v640 = vadd.f32 %v570, %v639
        %v641 = vpop.f32.mrb[0].mxu0
        %v642 = vpop.f32.mrb[0].mxu0
        %v643 = vadd.f32 %v573, %v642
        %v644 = vpop.f32.mrb[0].mxu0
        %645 = vmatprep.mubr.bf16.mxu0 0
        %646 = vmatmul.mubr.bf16.gmra.mrb[0].mxu0 %v599
        %v647 = vpop.f32.mrb[0].mxu0
        %v648 = vadd.f32 %v578, %v647
        %v649 = vpop.f32.mrb[0].mxu0
        %v650 = vpop.f32.mrb[0].mxu0
        %v651 = vadd.f32 %v581, %v650
        %v652 = vpop.f32.mrb[0].mxu0
        %653 = vdwg.mxu0
        %v654 = vld [vmem:[%s6] sm:$0xff]
        %v655 = vld [vmem:[%s6 + $0x8] sm:$0xff]
        %v656 = vld [vmem:[%s6 + $0x10] sm:$0xff]
        %v657 = vld [vmem:[%s6 + $0x18] sm:$0xff]
        %659 = vset.pattern.permute.xlu0 0
        %660 = vperm.xlu0 %659, %v654
        %v661 = vpop.permute.xlu0 %660
        %664 = vset.pattern.permute.xlu0 0
        %665 = vperm.xlu0 %664, %v655
        %v666 = vpop.permute.xlu0 %665
        %669 = vset.pattern.permute.xlu0 0
        %670 = vperm.xlu0 %669, %v656
        %v671 = vpop.permute.xlu0 %670
        %674 = vset.pattern.permute.xlu0 0
        %675 = vperm.xlu0 %674, %v657
        %v676 = vpop.permute.xlu0 %675
        %v678 = vlaneseq
        %v679 = vshrl.u32 %v678, 7
        %v680 = vsub.s32 0, %v679
        %v681 = vrot.slane %v477, %v680
        %v682 = vmul.f32 %v661, %v681
        %v683 = vmul.f32 %v666, %v681
        %v684 = vmul.f32 %v671, %v681
        %v685 = vmul.f32 %v676, %v681
        %v686 = vadd.f32 %v640, %v682
        %v687 = vadd.f32 %v643, %v683
        %v688 = vadd.f32 %v648, %v684
        %v689 = vadd.f32 %v651, %v685
        %v690 = vld [vmem:[%s7] sm:$0xff]
        %v691 = vld [vmem:[%s7 + $0x8] sm:$0xff]
        %v692 = vld [vmem:[%s7 + $0x10] sm:$0xff]
        %v693 = vld [vmem:[%s7 + $0x18] sm:$0xff]
        %695 = vset.pattern.permute.xlu0 0
        %696 = vperm.xlu0 %695, %v690
        %v697 = vpop.permute.xlu0 %696
        %700 = vset.pattern.permute.xlu0 0
        %701 = vperm.xlu0 %700, %v691
        %v702 = vpop.permute.xlu0 %701
        %705 = vset.pattern.permute.xlu0 0
        %706 = vperm.xlu0 %705, %v692
        %v707 = vpop.permute.xlu0 %706
        %710 = vset.pattern.permute.xlu0 0
        %711 = vperm.xlu0 %710, %v693
        %v712 = vpop.permute.xlu0 %711
        %v714 = vadd.f32 %v686, %v697
        %v715 = vadd.f32 %v687, %v702
        %v716 = vadd.f32 %v688, %v707
        %v717 = vadd.f32 %v689, %v712
        %v718 = vmax.f32 %v714, 0.0
        %v719 = vmax.f32 %v715, 0.0
        %v720 = vmax.f32 %v716, 0.0
        %v721 = vmax.f32 %v717, 0.0
        %v722 = vpack.c.bf16 %v719, %v718
        %v723 = vpack.c.bf16 %v721, %v720
        %v724 = vld [vmem:[%s8] sm:$0x3]
        %v725 = vld [vmem:[%s9] sm:$0xf]
        %727 = vset.pattern.permute.xlu0 0
        %728 = vperm.xlu0 %727, %v725
        %v729 = vpop.permute.xlu0 %728
        %v732 = vsel %vm528, %v724, 0
        %734 = vmatprep.subr.bf16.mxu0 0
        %735 = vmatpush1.bf16.msra.mxu0 %v722
        %736 = vmatprep.subr.bf16.mxu0 0
        %737 = vmatpush1.bf16.msra.mxu0 %v723
        %738 = vmatprep.subr.bf16.mxu0 0
        %739 = vmatpush1.bf16.msra.mxu0 0
        %740 = vmatprep.subr.bf16.mxu0 0
        %741 = vmatpush1.bf16.msra.mxu0 0
        %742 = vmatprep.subr.bf16.mxu0 0
        %743 = vmatpush1.bf16.msra.mxu0 0
        %744 = vmatprep.subr.bf16.mxu0 0
        %745 = vmatpush1.bf16.msra.mxu0 0
        %746 = vmatprep.subr.bf16.mxu0 0
        %747 = vmatpush1.bf16.msra.mxu0 0
        %748 = vmatprep.subr.bf16.mxu0 0
        %749 = vmatpush1.bf16.msra.mxu0 0
        %750 = vmatprep.subr.bf16.mxu0 0
        %751 = vmatpush1.bf16.msra.mxu0 0
        %752 = vmatprep.subr.bf16.mxu0 0
        %753 = vmatpush1.bf16.msra.mxu0 0
        %754 = vmatprep.subr.bf16.mxu0 0
        %755 = vmatpush1.bf16.msra.mxu0 0
        %756 = vmatprep.subr.bf16.mxu0 0
        %757 = vmatpush1.bf16.msra.mxu0 0
        %758 = vmatprep.subr.bf16.mxu0 0
        %759 = vmatpush1.bf16.msra.mxu0 0
        %760 = vmatprep.subr.bf16.mxu0 0
        %761 = vmatpush1.bf16.msra.mxu0 0
        %762 = vmatprep.subr.bf16.mxu0 0
        %763 = vmatpush1.bf16.msra.mxu0 0
        %764 = vmatprep.subr.bf16.mxu0 0
        %765 = vmatpush1.bf16.msra.mxu0 0
        %766 = vmatprep.mubr.bf16.mxu0 0
        %767 = vmatmul.mubr.bf16.gmra.mrb[0].mxu0 %v732
        %v768 = vpop.f32.mrb[0].mxu0
        %v769 = vadd.f32 %v729, %v768
        %v770 = vpop.f32.mrb[0].mxu0
        %v771 = vpop.f32.mrb[0].mxu0
        %v772 = vpop.f32.mrb[0].mxu0
        %773 = vdwg.mxu0
        %v774 = vsub.f32 %v466, 1.0
        %v775 = vlaneseq
        %v776 = vshrl.u32 %v775, 7
        %v777 = vsub.s32 0, %v776
        %v778 = vrot.slane %v774, %v777
        %v779 = vmul.f32 %v778, %v769
        %v780 = vsub.f32 %v492, %v779
        %v781 = vlaneseq
        %v782 = vshrl.u32 %v781, 7
        %v783 = vsub.s32 0, %v782
        %v784 = vrot.slane %v474, %v783
        %v785 = vmul.f32 %v780, %v784
        %v786 = vmul.f32 %v466, %v466
        %v787 = vsub.f32 %v786, %v466
        %v788 = vadd.f32 %v787, 1.0
        %v789 = vrcp.pop %v466
        %v790 = vmul.f32 %v788, %v789
        %v791 = vadd.f32 %v481, 0.001
        %v792 = vrcp.pop %v791
        %v793 = vmul.f32 %v788, %v792
        %v794 = vsub.f32 %v769, %v480
        %v795 = vand.u32 2147483647, %v794
        %vm796 = vcmp.lt.f32.partialorder %v795, 1.0
        %v797 = vmul.f32 %v794, 0.5
        %v798 = vmul.f32 %v797, %v794
        %v799 = vsub.f32 %v795, 0.5
        %v800 = vsel %vm796, %v798, %v799
        %v801 = vlaneseq
        %v802 = vshrl.u32 %v801, 7
        %v803 = vsub.s32 0, %v802
        %v804 = vrot.slane %v790, %v803
        %v805 = vmul.f32 %v804, %v800
        %v806 = vsub.f32 %v785, %v479
        %v807 = vand.u32 2147483647, %v806
        %vm808 = vcmp.lt.f32.partialorder %v807, 1.0
        %v809 = vmul.f32 %v806, 0.5
        %v810 = vmul.f32 %v809, %v806
        %v811 = vsub.f32 %v807, 0.5
        %v812 = vsel %vm808, %v810, %v811
        %v813 = vlaneseq
        %v814 = vshrl.u32 %v813, 7
        %v815 = vsub.s32 0, %v814
        %v816 = vrot.slane %v793, %v815
        %v817 = vmul.f32 %v816, %v812
        %v818 = vadd.f32 %v805, %v817
        %vm819 = vcmask 1043456
        %v820 = vsel %vm819, %v818, 0.0
        %v821 = vrot.slane %v820, 4
        %v822 = vadd.f32 %v820, %v821
        %v823 = vrot.slane %v822, 2
        %v824 = vadd.f32 %v822, %v823
        %v825 = vrot.slane %v824, 1
        %v826 = vadd.f32 %v824, %v825
        %v827 = vsel %vm464, %v826, 0.0
        %vm828 = vcmask 1040384
        %v829 = vsel %vm828, %v827, 0.0
        %830 = vadd.xlane.f32.xlu0 %v829
        %v831 = vpop.xlane.xlu0 %830
        %v832 = vrot.slane %v831, 4
        %v833 = vadd.f32 %v831, %v832
        %v834 = vrot.slane %v833, 2
        %v835 = vadd.f32 %v833, %v834
        %v836 = vrot.slane %v835, 1
        %v837 = vadd.f32 %v835, %v836
        %s838 = vtos %v837
        %vm839 = vcmp.eq.s32.totalorder %v460, 0
        %v840 = vstv %s838
        %v841 = vsel %vm839, %v840, 0.0
        %842 = vst [vmem:[%s446] sm:$0x1] %v841
        %s843 = sand.u32 %s262, 1
        %s844 = scalar_lea.sflag [#allocation4], %s843
        %s845 = sand.u32 %s262, 1
        %s846 = scalar_lea.vmem [#allocation3], %s845
        // Predicated region
        $region102: #{tpu_custom_call.1} parent=96 // pred_check
          %p847 = pneg %p272
        $region103: #{tpu_custom_call.1} parent=96 // pred_check_branch
          %849 = sbr.rel (%p847) target = $region105
        $region104: #{tpu_custom_call.1} parent=96 // pred_region
          %s851 = ssub.s32 16, 16
          %852 = vsyncadd %s844, %s851
          %s853 = smul.addr %s24, 16
          %s854 = scalar_lea.hbm %s10, %s853
          %s856 = sshll.u32 %s846, 4
          %s857 = int_to_ptr.vmem [resolvable:$true] %s856
          %859 = dma.vmem_to_hbm [thread:$0]  %s857, 16, %s854, %s844
        $region105: #{tpu_custom_call.1} parent=96 // pred_fallthru
          _
      $region97: #{tpu_custom_call.1} parent=5 // pred_fallthru
        _
      %p860 = scmp.le.s32.totalorder 2, %s19
      // Predicated region
      $region106: #{tpu_custom_call.1} parent=5 // pred_check
        %p861 = pneg %p860
      $region107: #{tpu_custom_call.1} parent=5 // pred_check_branch
        %863 = sbr.rel (%p861) target = $region109
      $region108: #{tpu_custom_call.1} parent=5 // pred_region
        %s864 = ssub.s32 %s19, 2
        // Predicated region
        $region110: #{tpu_custom_call.1} parent=108 // pred_check
          %p865 = pneg %p278
        $region111: #{tpu_custom_call.1} parent=108 // pred_check_branch
          %867 = sbr.rel (%p865) target = $region113
        $region112: #{tpu_custom_call.1} parent=108 // pred_region
          %s868 = sand.u32 %s263, 1
          %s869 = scalar_lea.sflag [#allocation4], %s868
          %s870 = sand.u32 %s263, 1
          %s871 = scalar_lea.vmem [#allocation3], %s870
          %872 = dma.done %s869, 16
        $region113: #{tpu_custom_call.1} parent=108 // pred_fallthru
          _
      $region109: #{tpu_custom_call.1} parent=5 // pred_fallthru
        _
    $region6: #{tpu_custom_call.1} parent=1 // loop_footer
      %s23 = sadd.s32 1, %s19
    $region7: #{tpu_custom_call.1} parent=1 // loop_footer_branch
      %18 = sbr.rel target = $region3
    $region8: #{tpu_custom_call.1} parent=1 // loop_exit
      _
    %873 = vsyncpa [#allocation4], 1
    %s874 = scalar_lea.sflag [#allocation4], 1
    %875 = vsyncpa %s874, 1

</llo_original>
